<compile_context>
chip_gen: v5e
topology: v5e:2x2
jax: 0.10.0
libtpu: 0.0.40
codegen_flags: <defaults>
</compile_context>

<pallas_src>
import functools

import jax
import jax.numpy as jnp
from jax.experimental import pallas as pl
from jax.experimental.pallas import tpu as pltpu  # noqa: F401  (TPU backend tuning hooks)

hidden_size = 5
input_size = 5
num_classes = 5
num_layers = 1
sequence_length = 6


def rnn_kernel(x_ref, wih_t_ref, whh_t_ref, b_ref, o_ref):
    """Whole-sequence RNN forward in one invocation.

    x_ref:     (T, B, I) full input (time-major), resident in VMEM
    wih_t_ref: (I, H)    W_ih transposed
    whh_t_ref: (H, H)    W_hh transposed
    b_ref:     (1, H)    fused bias (b_ih + b_hh)
    o_ref:     (T, B, H) full output (time-major), written back to HBM once
    """
    T, B, I = x_ref.shape
    H = whh_t_ref.shape[1]

    x = x_ref[...].astype(jnp.float32)        # (T, B, I)
    wih_t = wih_t_ref[...]                    # (I, H)
    whh_t = whh_t_ref[...]                    # (H, H)

    # ---- Hoisted, non-recurrent input projection + fused bias -------------
    # P[t, b, :] = x[t, b, :] @ W_ih^T + (b_ih + b_hh)
    # I = 5, so this is 5 broadcast-FMAs on the VPU; no MXU round-trip, and it
    # is off the serial h-dependency chain.
    p = jnp.broadcast_to(b_ref[...], (T, B, H)).astype(jnp.float32)
    for i in range(I):  # static, fully visible to the scheduler
        p = p + x[:, :, i:i + 1] * wih_t[i:i + 1, :]          # (T,B,1)*(1,H)

    # Pre-broadcast W_hh^T rows once (outside the time loop; JAX does not CSE
    # broadcast_in_dim, so doing it inside would re-emit it T*H times).
    w_rows = [jnp.broadcast_to(whh_t[k:k + 1, :], (B, H)) for k in range(H)]

    # ---- Serial recurrence: only the tiny h-dependent part remains --------
    h = jnp.zeros((B, H), jnp.float32)        # h_0 = zeros, as in the module
    for t in range(T):                        # T = 6, statically unrolled
        acc = p[t]                            # (B, H): leading-axis pick, no relayout
        for k in range(H):                    # h @ W_hh^T as VPU broadcast-FMAs
            acc = acc + h[:, k:k + 1] * w_rows[k]
        h = jnp.tanh(acc)                     # EUP
        o_ref[t] = h.astype(o_ref.dtype)      # natural full-(B,H)-tile store


@functools.partial(jax.jit, static_argnames=())
def rnn_forward(x, w_ih, w_hh, b_ih, b_hh):
    """Pallas implementation of the RNN module's forward pass.

    x:    (B, T, I) float32 (batch_first, like the PyTorch module)
    w_ih: (H, I), w_hh: (H, H), b_ih: (H,), b_hh: (H,)
    returns: (B*T, num_classes) float32  (matches out.view(-1, num_classes))
    """
    B, T, I = x.shape
    H = w_hh.shape[0]

    # Glue in plain JAX (fused into the same jitted executable): pre-transpose
    # weights, fuse the two biases, and go time-major for the kernel.
    w_ih_t = jnp.transpose(w_ih).astype(jnp.float32)        # (I, H)
    w_hh_t = jnp.transpose(w_hh).astype(jnp.float32)        # (H, H)
    b = (b_ih + b_hh).reshape(1, H).astype(jnp.float32)     # (1, H)
    x_tbi = jnp.transpose(x, (1, 0, 2)).astype(jnp.float32)  # (T, B, I)

    # No grid: single invocation, every operand is a full-array VMEM block
    # (one DMA in per operand, one contiguous DMA out for the (T, B, H) slab).
    out_tbh = pl.pallas_call(
        rnn_kernel,
        out_shape=jax.ShapeDtypeStruct((T, B, H), jnp.float32),
    )(x_tbi, w_ih_t, w_hh_t, b)

    # Back to batch-first, then the module's `out.view(-1, num_classes)`.
    # NOTE: this relies on hidden_size == num_classes, exactly like the
    # PyTorch module (there is no Linear head).
    out_bth = jnp.transpose(out_tbh, (1, 0, 2))              # (B, T, H)
    return out_bth.reshape(-1, num_classes)


def rnn_reference(x, w_ih, w_hh, b_ih, b_hh):
    """Pure-JAX reference of the same recurrence (for correctness check)."""
    B, T, I = x.shape
    H = w_hh.shape[0]

    def step(h, x_t):
        h_new = jnp.tanh(x_t @ w_ih.T + b_ih + h @ w_hh.T + b_hh)
        return h_new, h_new

    h0 = jnp.zeros((B, H), jnp.float32)
    _, outs = jax.lax.scan(step, h0, jnp.transpose(x, (1, 0, 2)))  # (T, B, H)
    return jnp.transpose(outs, (1, 0, 2)).reshape(-1, num_classes)


if __name__ == "__main__":
    key = jax.random.PRNGKey(0)
    k_x, k_wih, k_whh, k_bih, k_bhh = jax.random.split(key, 5)

    batch = 3
    # Input consistent with the module: (batch, sequence_length, input_size)
    x = jax.random.normal(k_x, (batch, sequence_length, input_size), jnp.float32)

    # Deterministic parameter init mimicking nn.RNN's U(-1/sqrt(H), 1/sqrt(H)).
    bound = 1.0 / jnp.sqrt(jnp.float32(hidden_size))
    w_ih = jax.random.uniform(k_wih, (hidden_size, input_size), jnp.float32, -bound, bound)
    w_hh = jax.random.uniform(k_whh, (hidden_size, hidden_size), jnp.float32, -bound, bound)
    b_ih = jax.random.uniform(k_bih, (hidden_size,), jnp.float32, -bound, bound)
    b_hh = jax.random.uniform(k_bhh, (hidden_size,), jnp.float32, -bound, bound)

    out = rnn_forward(x, w_ih, w_hh, b_ih, b_hh)
    jax.block_until_ready(out)

    ref = rnn_reference(x, w_ih, w_hh, b_ih, b_hh)
    assert out.shape == (batch * sequence_length, num_classes), out.shape
    assert jnp.allclose(out, ref, atol=1e-5, rtol=1e-5), float(jnp.max(jnp.abs(out - ref)))

    print("KERNEL_OK")
</pallas_src>

<mosaic_0001>
module attributes {stable_mosaic.version = 11 : i64} {
  func.func @rnn_kernel(%arg0: memref<6x3x5xf32, #tpu.memory_space<vmem>>, %arg1: memref<5x5xf32, #tpu.memory_space<vmem>>, %arg2: memref<5x5xf32, #tpu.memory_space<vmem>>, %arg3: memref<1x5xf32, #tpu.memory_space<vmem>>, %arg4: memref<6x3x5xf32, #tpu.memory_space<vmem>>) attributes {dimension_semantics = [], scalar_prefetch = 0 : i64, scratch_operands = 0 : i64, tpu.core_type = #tpu.core_type<tc>} {
    %c0 = arith.constant 0 : index
    %c0_0 = arith.constant 0 : index
    %c0_1 = arith.constant 0 : index
    %0 = vector.load %arg0[%c0, %c0_0, %c0_1] : memref<6x3x5xf32, #tpu.memory_space<vmem>>, vector<6x3x5xf32>
    %c0_2 = arith.constant 0 : index
    %c0_3 = arith.constant 0 : index
    %1 = vector.load %arg1[%c0_2, %c0_3] : memref<5x5xf32, #tpu.memory_space<vmem>>, vector<5x5xf32>
    %c0_4 = arith.constant 0 : index
    %c0_5 = arith.constant 0 : index
    %2 = vector.load %arg2[%c0_4, %c0_5] : memref<5x5xf32, #tpu.memory_space<vmem>>, vector<5x5xf32>
    %c0_6 = arith.constant 0 : index
    %c0_7 = arith.constant 0 : index
    %3 = vector.load %arg3[%c0_6, %c0_7] : memref<1x5xf32, #tpu.memory_space<vmem>>, vector<1x5xf32>
    %4 = vector.shape_cast %3 : vector<1x5xf32> to vector<1x1x5xf32>
    %5 = vector.broadcast %4 : vector<1x1x5xf32> to vector<6x3x5xf32>
    %6 = vector.extract_strided_slice %0 {offsets = [0, 0, 0], sizes = [6, 3, 1], strides = [1, 1, 1]} : vector<6x3x5xf32> to vector<6x3x1xf32>
    %7 = vector.extract_strided_slice %1 {offsets = [0, 0], sizes = [1, 5], strides = [1, 1]} : vector<5x5xf32> to vector<1x5xf32>
    %8 = vector.shape_cast %7 : vector<1x5xf32> to vector<1x1x5xf32>
    %9 = vector.broadcast %6 : vector<6x3x1xf32> to vector<6x3x5xf32>
    %10 = vector.broadcast %8 : vector<1x1x5xf32> to vector<6x3x5xf32>
    %11 = arith.mulf %9, %10 : vector<6x3x5xf32>
    %12 = arith.addf %5, %11 : vector<6x3x5xf32>
    %13 = vector.extract_strided_slice %0 {offsets = [0, 0, 1], sizes = [6, 3, 1], strides = [1, 1, 1]} : vector<6x3x5xf32> to vector<6x3x1xf32>
    %14 = vector.extract_strided_slice %1 {offsets = [1, 0], sizes = [1, 5], strides = [1, 1]} : vector<5x5xf32> to vector<1x5xf32>
    %15 = vector.shape_cast %14 : vector<1x5xf32> to vector<1x1x5xf32>
    %16 = vector.broadcast %13 : vector<6x3x1xf32> to vector<6x3x5xf32>
    %17 = vector.broadcast %15 : vector<1x1x5xf32> to vector<6x3x5xf32>
    %18 = arith.mulf %16, %17 : vector<6x3x5xf32>
    %19 = arith.addf %12, %18 : vector<6x3x5xf32>
    %20 = vector.extract_strided_slice %0 {offsets = [0, 0, 2], sizes = [6, 3, 1], strides = [1, 1, 1]} : vector<6x3x5xf32> to vector<6x3x1xf32>
    %21 = vector.extract_strided_slice %1 {offsets = [2, 0], sizes = [1, 5], strides = [1, 1]} : vector<5x5xf32> to vector<1x5xf32>
    %22 = vector.shape_cast %21 : vector<1x5xf32> to vector<1x1x5xf32>
    %23 = vector.broadcast %20 : vector<6x3x1xf32> to vector<6x3x5xf32>
    %24 = vector.broadcast %22 : vector<1x1x5xf32> to vector<6x3x5xf32>
    %25 = arith.mulf %23, %24 : vector<6x3x5xf32>
    %26 = arith.addf %19, %25 : vector<6x3x5xf32>
    %27 = vector.extract_strided_slice %0 {offsets = [0, 0, 3], sizes = [6, 3, 1], strides = [1, 1, 1]} : vector<6x3x5xf32> to vector<6x3x1xf32>
    %28 = vector.extract_strided_slice %1 {offsets = [3, 0], sizes = [1, 5], strides = [1, 1]} : vector<5x5xf32> to vector<1x5xf32>
    %29 = vector.shape_cast %28 : vector<1x5xf32> to vector<1x1x5xf32>
    %30 = vector.broadcast %27 : vector<6x3x1xf32> to vector<6x3x5xf32>
    %31 = vector.broadcast %29 : vector<1x1x5xf32> to vector<6x3x5xf32>
    %32 = arith.mulf %30, %31 : vector<6x3x5xf32>
    %33 = arith.addf %26, %32 : vector<6x3x5xf32>
    %34 = vector.extract_strided_slice %0 {offsets = [0, 0, 4], sizes = [6, 3, 1], strides = [1, 1, 1]} : vector<6x3x5xf32> to vector<6x3x1xf32>
    %35 = vector.extract_strided_slice %1 {offsets = [4, 0], sizes = [1, 5], strides = [1, 1]} : vector<5x5xf32> to vector<1x5xf32>
    %36 = vector.shape_cast %35 : vector<1x5xf32> to vector<1x1x5xf32>
    %37 = vector.broadcast %34 : vector<6x3x1xf32> to vector<6x3x5xf32>
    %38 = vector.broadcast %36 : vector<1x1x5xf32> to vector<6x3x5xf32>
    %39 = arith.mulf %37, %38 : vector<6x3x5xf32>
    %40 = arith.addf %33, %39 : vector<6x3x5xf32>
    %41 = vector.extract_strided_slice %2 {offsets = [0, 0], sizes = [1, 5], strides = [1, 1]} : vector<5x5xf32> to vector<1x5xf32>
    %42 = vector.shape_cast %41 : vector<1x5xf32> to vector<1x5xf32>
    %43 = vector.broadcast %42 : vector<1x5xf32> to vector<3x5xf32>
    %44 = vector.extract_strided_slice %2 {offsets = [1, 0], sizes = [1, 5], strides = [1, 1]} : vector<5x5xf32> to vector<1x5xf32>
    %45 = vector.shape_cast %44 : vector<1x5xf32> to vector<1x5xf32>
    %46 = vector.broadcast %45 : vector<1x5xf32> to vector<3x5xf32>
    %47 = vector.extract_strided_slice %2 {offsets = [2, 0], sizes = [1, 5], strides = [1, 1]} : vector<5x5xf32> to vector<1x5xf32>
    %48 = vector.shape_cast %47 : vector<1x5xf32> to vector<1x5xf32>
    %49 = vector.broadcast %48 : vector<1x5xf32> to vector<3x5xf32>
    %50 = vector.extract_strided_slice %2 {offsets = [3, 0], sizes = [1, 5], strides = [1, 1]} : vector<5x5xf32> to vector<1x5xf32>
    %51 = vector.shape_cast %50 : vector<1x5xf32> to vector<1x5xf32>
    %52 = vector.broadcast %51 : vector<1x5xf32> to vector<3x5xf32>
    %53 = vector.extract_strided_slice %2 {offsets = [4, 0], sizes = [1, 5], strides = [1, 1]} : vector<5x5xf32> to vector<1x5xf32>
    %54 = vector.shape_cast %53 : vector<1x5xf32> to vector<1x5xf32>
    %55 = vector.broadcast %54 : vector<1x5xf32> to vector<3x5xf32>
    %cst = arith.constant 0.000000e+00 : f32
    %56 = vector.broadcast %cst : f32 to vector<3x5xf32>
    %57 = vector.extract_strided_slice %40 {offsets = [0, 0, 0], sizes = [1, 3, 5], strides = [1, 1, 1]} : vector<6x3x5xf32> to vector<1x3x5xf32>
    %58 = vector.shape_cast %57 : vector<1x3x5xf32> to vector<3x5xf32>
    %59 = vector.extract_strided_slice %56 {offsets = [0, 0], sizes = [3, 1], strides = [1, 1]} : vector<3x5xf32> to vector<3x1xf32>
    %60 = vector.broadcast %59 : vector<3x1xf32> to vector<3x5xf32>
    %61 = arith.mulf %60, %43 : vector<3x5xf32>
    %62 = arith.addf %58, %61 : vector<3x5xf32>
    %63 = vector.extract_strided_slice %56 {offsets = [0, 1], sizes = [3, 1], strides = [1, 1]} : vector<3x5xf32> to vector<3x1xf32>
    %64 = vector.broadcast %63 : vector<3x1xf32> to vector<3x5xf32>
    %65 = arith.mulf %64, %46 : vector<3x5xf32>
    %66 = arith.addf %62, %65 : vector<3x5xf32>
    %67 = vector.extract_strided_slice %56 {offsets = [0, 2], sizes = [3, 1], strides = [1, 1]} : vector<3x5xf32> to vector<3x1xf32>
    %68 = vector.broadcast %67 : vector<3x1xf32> to vector<3x5xf32>
    %69 = arith.mulf %68, %49 : vector<3x5xf32>
    %70 = arith.addf %66, %69 : vector<3x5xf32>
    %71 = vector.extract_strided_slice %56 {offsets = [0, 3], sizes = [3, 1], strides = [1, 1]} : vector<3x5xf32> to vector<3x1xf32>
    %72 = vector.broadcast %71 : vector<3x1xf32> to vector<3x5xf32>
    %73 = arith.mulf %72, %52 : vector<3x5xf32>
    %74 = arith.addf %70, %73 : vector<3x5xf32>
    %75 = vector.extract_strided_slice %56 {offsets = [0, 4], sizes = [3, 1], strides = [1, 1]} : vector<3x5xf32> to vector<3x1xf32>
    %76 = vector.broadcast %75 : vector<3x1xf32> to vector<3x5xf32>
    %77 = arith.mulf %76, %55 : vector<3x5xf32>
    %78 = arith.addf %74, %77 : vector<3x5xf32>
    %79 = math.tanh %78 : vector<3x5xf32>
    %c0_8 = arith.constant 0 : index
    %c0_9 = arith.constant 0 : index
    %c0_10 = arith.constant 0 : index
    %80 = vector.load %arg4[%c0_8, %c0_9, %c0_10] : memref<6x3x5xf32, #tpu.memory_space<vmem>>, vector<1x3x5xf32>
    %81 = vector.shape_cast %80 : vector<1x3x5xf32> to vector<3x5xf32>
    %82 = vector.shape_cast %79 : vector<3x5xf32> to vector<1x3x5xf32>
    tpu.vector_store %arg4[%c0_8, %c0_9, %c0_10], %82 {strides = array<i32>} : memref<6x3x5xf32, #tpu.memory_space<vmem>>, vector<1x3x5xf32>,
    %83 = vector.extract_strided_slice %40 {offsets = [1, 0, 0], sizes = [1, 3, 5], strides = [1, 1, 1]} : vector<6x3x5xf32> to vector<1x3x5xf32>
    %84 = vector.shape_cast %83 : vector<1x3x5xf32> to vector<3x5xf32>
    %85 = vector.extract_strided_slice %79 {offsets = [0, 0], sizes = [3, 1], strides = [1, 1]} : vector<3x5xf32> to vector<3x1xf32>
    %86 = vector.broadcast %85 : vector<3x1xf32> to vector<3x5xf32>
    %87 = arith.mulf %86, %43 : vector<3x5xf32>
    %88 = arith.addf %84, %87 : vector<3x5xf32>
    %89 = vector.extract_strided_slice %79 {offsets = [0, 1], sizes = [3, 1], strides = [1, 1]} : vector<3x5xf32> to vector<3x1xf32>
    %90 = vector.broadcast %89 : vector<3x1xf32> to vector<3x5xf32>
    %91 = arith.mulf %90, %46 : vector<3x5xf32>
    %92 = arith.addf %88, %91 : vector<3x5xf32>
    %93 = vector.extract_strided_slice %79 {offsets = [0, 2], sizes = [3, 1], strides = [1, 1]} : vector<3x5xf32> to vector<3x1xf32>
    %94 = vector.broadcast %93 : vector<3x1xf32> to vector<3x5xf32>
    %95 = arith.mulf %94, %49 : vector<3x5xf32>
    %96 = arith.addf %92, %95 : vector<3x5xf32>
    %97 = vector.extract_strided_slice %79 {offsets = [0, 3], sizes = [3, 1], strides = [1, 1]} : vector<3x5xf32> to vector<3x1xf32>
    %98 = vector.broadcast %97 : vector<3x1xf32> to vector<3x5xf32>
    %99 = arith.mulf %98, %52 : vector<3x5xf32>
    %100 = arith.addf %96, %99 : vector<3x5xf32>
    %101 = vector.extract_strided_slice %79 {offsets = [0, 4], sizes = [3, 1], strides = [1, 1]} : vector<3x5xf32> to vector<3x1xf32>
    %102 = vector.broadcast %101 : vector<3x1xf32> to vector<3x5xf32>
    %103 = arith.mulf %102, %55 : vector<3x5xf32>
    %104 = arith.addf %100, %103 : vector<3x5xf32>
    %105 = math.tanh %104 : vector<3x5xf32>
    %c1 = arith.constant 1 : index
    %c0_11 = arith.constant 0 : index
    %c0_12 = arith.constant 0 : index
    %106 = vector.load %arg4[%c1, %c0_11, %c0_12] : memref<6x3x5xf32, #tpu.memory_space<vmem>>, vector<1x3x5xf32>
    %107 = vector.shape_cast %106 : vector<1x3x5xf32> to vector<3x5xf32>
    %108 = vector.shape_cast %105 : vector<3x5xf32> to vector<1x3x5xf32>
    tpu.vector_store %arg4[%c1, %c0_11, %c0_12], %108 {strides = array<i32>} : memref<6x3x5xf32, #tpu.memory_space<vmem>>, vector<1x3x5xf32>,
    %109 = vector.extract_strided_slice %40 {offsets = [2, 0, 0], sizes = [1, 3, 5], strides = [1, 1, 1]} : vector<6x3x5xf32> to vector<1x3x5xf32>
    %110 = vector.shape_cast %109 : vector<1x3x5xf32> to vector<3x5xf32>
    %111 = vector.extract_strided_slice %105 {offsets = [0, 0], sizes = [3, 1], strides = [1, 1]} : vector<3x5xf32> to vector<3x1xf32>
    %112 = vector.broadcast %111 : vector<3x1xf32> to vector<3x5xf32>
    %113 = arith.mulf %112, %43 : vector<3x5xf32>
    %114 = arith.addf %110, %113 : vector<3x5xf32>
    %115 = vector.extract_strided_slice %105 {offsets = [0, 1], sizes = [3, 1], strides = [1, 1]} : vector<3x5xf32> to vector<3x1xf32>
    %116 = vector.broadcast %115 : vector<3x1xf32> to vector<3x5xf32>
    %117 = arith.mulf %116, %46 : vector<3x5xf32>
    %118 = arith.addf %114, %117 : vector<3x5xf32>
    %119 = vector.extract_strided_slice %105 {offsets = [0, 2], sizes = [3, 1], strides = [1, 1]} : vector<3x5xf32> to vector<3x1xf32>
    %120 = vector.broadcast %119 : vector<3x1xf32> to vector<3x5xf32>
    %121 = arith.mulf %120, %49 : vector<3x5xf32>
    %122 = arith.addf %118, %121 : vector<3x5xf32>
    %123 = vector.extract_strided_slice %105 {offsets = [0, 3], sizes = [3, 1], strides = [1, 1]} : vector<3x5xf32> to vector<3x1xf32>
    %124 = vector.broadcast %123 : vector<3x1xf32> to vector<3x5xf32>
    %125 = arith.mulf %124, %52 : vector<3x5xf32>
    %126 = arith.addf %122, %125 : vector<3x5xf32>
    %127 = vector.extract_strided_slice %105 {offsets = [0, 4], sizes = [3, 1], strides = [1, 1]} : vector<3x5xf32> to vector<3x1xf32>
    %128 = vector.broadcast %127 : vector<3x1xf32> to vector<3x5xf32>
    %129 = arith.mulf %128, %55 : vector<3x5xf32>
    %130 = arith.addf %126, %129 : vector<3x5xf32>
    %131 = math.tanh %130 : vector<3x5xf32>
    %c2 = arith.constant 2 : index
    %c0_13 = arith.constant 0 : index
    %c0_14 = arith.constant 0 : index
    %132 = vector.load %arg4[%c2, %c0_13, %c0_14] : memref<6x3x5xf32, #tpu.memory_space<vmem>>, vector<1x3x5xf32>
    %133 = vector.shape_cast %132 : vector<1x3x5xf32> to vector<3x5xf32>
    %134 = vector.shape_cast %131 : vector<3x5xf32> to vector<1x3x5xf32>
    tpu.vector_store %arg4[%c2, %c0_13, %c0_14], %134 {strides = array<i32>} : memref<6x3x5xf32, #tpu.memory_space<vmem>>, vector<1x3x5xf32>,
    %135 = vector.extract_strided_slice %40 {offsets = [3, 0, 0], sizes = [1, 3, 5], strides = [1, 1, 1]} : vector<6x3x5xf32> to vector<1x3x5xf32>
    %136 = vector.shape_cast %135 : vector<1x3x5xf32> to vector<3x5xf32>
    %137 = vector.extract_strided_slice %131 {offsets = [0, 0], sizes = [3, 1], strides = [1, 1]} : vector<3x5xf32> to vector<3x1xf32>
    %138 = vector.broadcast %137 : vector<3x1xf32> to vector<3x5xf32>
    %139 = arith.mulf %138, %43 : vector<3x5xf32>
    %140 = arith.addf %136, %139 : vector<3x5xf32>
    %141 = vector.extract_strided_slice %131 {offsets = [0, 1], sizes = [3, 1], strides = [1, 1]} : vector<3x5xf32> to vector<3x1xf32>
    %142 = vector.broadcast %141 : vector<3x1xf32> to vector<3x5xf32>
    %143 = arith.mulf %142, %46 : vector<3x5xf32>
    %144 = arith.addf %140, %143 : vector<3x5xf32>
    %145 = vector.extract_strided_slice %131 {offsets = [0, 2], sizes = [3, 1], strides = [1, 1]} : vector<3x5xf32> to vector<3x1xf32>
    %146 = vector.broadcast %145 : vector<3x1xf32> to vector<3x5xf32>
    %147 = arith.mulf %146, %49 : vector<3x5xf32>
    %148 = arith.addf %144, %147 : vector<3x5xf32>
    %149 = vector.extract_strided_slice %131 {offsets = [0, 3], sizes = [3, 1], strides = [1, 1]} : vector<3x5xf32> to vector<3x1xf32>
    %150 = vector.broadcast %149 : vector<3x1xf32> to vector<3x5xf32>
    %151 = arith.mulf %150, %52 : vector<3x5xf32>
    %152 = arith.addf %148, %151 : vector<3x5xf32>
    %153 = vector.extract_strided_slice %131 {offsets = [0, 4], sizes = [3, 1], strides = [1, 1]} : vector<3x5xf32> to vector<3x1xf32>
    %154 = vector.broadcast %153 : vector<3x1xf32> to vector<3x5xf32>
    %155 = arith.mulf %154, %55 : vector<3x5xf32>
    %156 = arith.addf %152, %155 : vector<3x5xf32>
    %157 = math.tanh %156 : vector<3x5xf32>
    %c3 = arith.constant 3 : index
    %c0_15 = arith.constant 0 : index
    %c0_16 = arith.constant 0 : index
    %158 = vector.load %arg4[%c3, %c0_15, %c0_16] : memref<6x3x5xf32, #tpu.memory_space<vmem>>, vector<1x3x5xf32>
    %159 = vector.shape_cast %158 : vector<1x3x5xf32> to vector<3x5xf32>
    %160 = vector.shape_cast %157 : vector<3x5xf32> to vector<1x3x5xf32>
    tpu.vector_store %arg4[%c3, %c0_15, %c0_16], %160 {strides = array<i32>} : memref<6x3x5xf32, #tpu.memory_space<vmem>>, vector<1x3x5xf32>,
    %161 = vector.extract_strided_slice %40 {offsets = [4, 0, 0], sizes = [1, 3, 5], strides = [1, 1, 1]} : vector<6x3x5xf32> to vector<1x3x5xf32>
    %162 = vector.shape_cast %161 : vector<1x3x5xf32> to vector<3x5xf32>
    %163 = vector.extract_strided_slice %157 {offsets = [0, 0], sizes = [3, 1], strides = [1, 1]} : vector<3x5xf32> to vector<3x1xf32>
    %164 = vector.broadcast %163 : vector<3x1xf32> to vector<3x5xf32>
    %165 = arith.mulf %164, %43 : vector<3x5xf32>
    %166 = arith.addf %162, %165 : vector<3x5xf32>
    %167 = vector.extract_strided_slice %157 {offsets = [0, 1], sizes = [3, 1], strides = [1, 1]} : vector<3x5xf32> to vector<3x1xf32>
    %168 = vector.broadcast %167 : vector<3x1xf32> to vector<3x5xf32>
    %169 = arith.mulf %168, %46 : vector<3x5xf32>
    %170 = arith.addf %166, %169 : vector<3x5xf32>
    %171 = vector.extract_strided_slice %157 {offsets = [0, 2], sizes = [3, 1], strides = [1, 1]} : vector<3x5xf32> to vector<3x1xf32>
    %172 = vector.broadcast %171 : vector<3x1xf32> to vector<3x5xf32>
    %173 = arith.mulf %172, %49 : vector<3x5xf32>
    %174 = arith.addf %170, %173 : vector<3x5xf32>
    %175 = vector.extract_strided_slice %157 {offsets = [0, 3], sizes = [3, 1], strides = [1, 1]} : vector<3x5xf32> to vector<3x1xf32>
    %176 = vector.broadcast %175 : vector<3x1xf32> to vector<3x5xf32>
    %177 = arith.mulf %176, %52 : vector<3x5xf32>
    %178 = arith.addf %174, %177 : vector<3x5xf32>
    %179 = vector.extract_strided_slice %157 {offsets = [0, 4], sizes = [3, 1], strides = [1, 1]} : vector<3x5xf32> to vector<3x1xf32>
    %180 = vector.broadcast %179 : vector<3x1xf32> to vector<3x5xf32>
    %181 = arith.mulf %180, %55 : vector<3x5xf32>
    %182 = arith.addf %178, %181 : vector<3x5xf32>
    %183 = math.tanh %182 : vector<3x5xf32>
    %c4 = arith.constant 4 : index
    %c0_17 = arith.constant 0 : index
    %c0_18 = arith.constant 0 : index
    %184 = vector.load %arg4[%c4, %c0_17, %c0_18] : memref<6x3x5xf32, #tpu.memory_space<vmem>>, vector<1x3x5xf32>
    %185 = vector.shape_cast %184 : vector<1x3x5xf32> to vector<3x5xf32>
    %186 = vector.shape_cast %183 : vector<3x5xf32> to vector<1x3x5xf32>
    tpu.vector_store %arg4[%c4, %c0_17, %c0_18], %186 {strides = array<i32>} : memref<6x3x5xf32, #tpu.memory_space<vmem>>, vector<1x3x5xf32>,
    %187 = vector.extract_strided_slice %40 {offsets = [5, 0, 0], sizes = [1, 3, 5], strides = [1, 1, 1]} : vector<6x3x5xf32> to vector<1x3x5xf32>
    %188 = vector.shape_cast %187 : vector<1x3x5xf32> to vector<3x5xf32>
    %189 = vector.extract_strided_slice %183 {offsets = [0, 0], sizes = [3, 1], strides = [1, 1]} : vector<3x5xf32> to vector<3x1xf32>
    %190 = vector.broadcast %189 : vector<3x1xf32> to vector<3x5xf32>
    %191 = arith.mulf %190, %43 : vector<3x5xf32>
    %192 = arith.addf %188, %191 : vector<3x5xf32>
    %193 = vector.extract_strided_slice %183 {offsets = [0, 1], sizes = [3, 1], strides = [1, 1]} : vector<3x5xf32> to vector<3x1xf32>
    %194 = vector.broadcast %193 : vector<3x1xf32> to vector<3x5xf32>
    %195 = arith.mulf %194, %46 : vector<3x5xf32>
    %196 = arith.addf %192, %195 : vector<3x5xf32>
    %197 = vector.extract_strided_slice %183 {offsets = [0, 2], sizes = [3, 1], strides = [1, 1]} : vector<3x5xf32> to vector<3x1xf32>
    %198 = vector.broadcast %197 : vector<3x1xf32> to vector<3x5xf32>
    %199 = arith.mulf %198, %49 : vector<3x5xf32>
    %200 = arith.addf %196, %199 : vector<3x5xf32>
    %201 = vector.extract_strided_slice %183 {offsets = [0, 3], sizes = [3, 1], strides = [1, 1]} : vector<3x5xf32> to vector<3x1xf32>
    %202 = vector.broadcast %201 : vector<3x1xf32> to vector<3x5xf32>
    %203 = arith.mulf %202, %52 : vector<3x5xf32>
    %204 = arith.addf %200, %203 : vector<3x5xf32>
    %205 = vector.extract_strided_slice %183 {offsets = [0, 4], sizes = [3, 1], strides = [1, 1]} : vector<3x5xf32> to vector<3x1xf32>
    %206 = vector.broadcast %205 : vector<3x1xf32> to vector<3x5xf32>
    %207 = arith.mulf %206, %55 : vector<3x5xf32>
    %208 = arith.addf %204, %207 : vector<3x5xf32>
    %209 = math.tanh %208 : vector<3x5xf32>
    %c5 = arith.constant 5 : index
    %c0_19 = arith.constant 0 : index
    %c0_20 = arith.constant 0 : index
    %210 = vector.load %arg4[%c5, %c0_19, %c0_20] : memref<6x3x5xf32, #tpu.memory_space<vmem>>, vector<1x3x5xf32>
    %211 = vector.shape_cast %210 : vector<1x3x5xf32> to vector<3x5xf32>
    %212 = vector.shape_cast %209 : vector<3x5xf32> to vector<1x3x5xf32>
    tpu.vector_store %arg4[%c5, %c0_19, %c0_20], %212 {strides = array<i32>} : memref<6x3x5xf32, #tpu.memory_space<vmem>>, vector<1x3x5xf32>,
    return
  }
}

</mosaic_0001>

<llo_original>
// kernel: rnn_forward.1
$region0: #{rnn_forward.1}
  #allocation0 [shape = 'u32[]', space=smem, size = 0x4, offset = 0x4, fixed_abs, tag = 'smem constant byte address 0x4 - core index']
  #allocation1 [shape = 'u32[72,128]{1,0:T(1,128)}', space=vmem, size = 0x9000, scoped, tag = 'internal scratch']
  %s0 = inlined_call_operand.vmem [shape: f32[6,3,5], index: 0, kind: input, shape index: {}]
  %s1 = inlined_call_operand.vmem [shape: f32[5,5], index: 1, kind: input, shape index: {}]
  %s2 = inlined_call_operand.vmem [shape: f32[5,5], index: 2, kind: input, shape index: {}]
  %s3 = inlined_call_operand.vmem [shape: f32[1,5], index: 3, kind: input, shape index: {}]
  %s4 = inlined_call_operand.vmem [shape: f32[6,3,5], index: 4, kind: output, shape index: {}]
  %s5 = sld [smem:[#allocation0]]
  $region26: #{rnn_forward.1} parent=0
    _
  %s7 = ssub.s32 1, %s5
  %s8 = scalar_select 0, %s7, %s5
  // Predicated region
  $region2: #{rnn_forward.1} parent=0 // pred_check
    _
  $region3: #{rnn_forward.1} parent=0 // pred_check_branch
    %10 = sbr.rel (0) target = $region5
  $region4: #{rnn_forward.1} parent=0 // pred_region
    _
  $region5: #{rnn_forward.1} parent=0 // pred_fallthru
    _
  // Predicated region
  $region6: #{rnn_forward.1} parent=0 // pred_check
    _
  $region7: #{rnn_forward.1} parent=0 // pred_check_branch
    %12 = sbr.rel (0) target = $region9
  $region8: #{rnn_forward.1} parent=0 // pred_region
    _
  $region9: #{rnn_forward.1} parent=0 // pred_fallthru
    _
  // Predicated region
  $region10: #{rnn_forward.1} parent=0 // pred_check
    _
  $region11: #{rnn_forward.1} parent=0 // pred_check_branch
    %14 = sbr.rel (0) target = $region13
  $region12: #{rnn_forward.1} parent=0 // pred_region
    _
  $region13: #{rnn_forward.1} parent=0 // pred_fallthru
    _
  // Predicated region
  $region14: #{rnn_forward.1} parent=0 // pred_check
    _
  $region15: #{rnn_forward.1} parent=0 // pred_check_branch
    %16 = sbr.rel (0) target = $region17
  $region16: #{rnn_forward.1} parent=0 // pred_region
    _
  $region17: #{rnn_forward.1} parent=0 // pred_fallthru
    _
  %v17 = vld [vmem:[%s0] sm:$0x7]
  %v18 = vld [vmem:[%s0 + $0x4] sm:$0x7]
  %v19 = vld [vmem:[%s0 + $0x8] sm:$0x7]
  %v20 = vld [vmem:[%s0 + $0xc] sm:$0x7]
  %v21 = vld [vmem:[%s0 + $0x10] sm:$0x7]
  %v22 = vld [vmem:[%s0 + $0x14] sm:$0x7]
  %v23 = vld [vmem:[%s1] sm:$0x1f]
  %v24 = vld [vmem:[%s2] sm:$0x1f]
  %v25 = vld [vmem:[%s3] sm:$0x1]
  %v27 = vperm.slane %v25, 0
  %30 = vset.pattern.permute.xlu0 0
  %31 = vperm.xlu0 %30, %v17
  %v32 = vpop.permute.xlu0 %31
  %35 = vset.pattern.permute.xlu0 0
  %36 = vperm.xlu0 %35, %v18
  %v37 = vpop.permute.xlu0 %36
  %40 = vset.pattern.permute.xlu0 0
  %41 = vperm.xlu0 %40, %v19
  %v42 = vpop.permute.xlu0 %41
  %45 = vset.pattern.permute.xlu0 0
  %46 = vperm.xlu0 %45, %v20
  %v47 = vpop.permute.xlu0 %46
  %50 = vset.pattern.permute.xlu0 0
  %51 = vperm.xlu0 %50, %v21
  %v52 = vpop.permute.xlu0 %51
  %55 = vset.pattern.permute.xlu0 0
  %56 = vperm.xlu0 %55, %v22
  %v57 = vpop.permute.xlu0 %56
  %v59 = vperm.slane %v23, 0
  %v60 = vmul.f32 %v32, %v59
  %v61 = vmul.f32 %v37, %v59
  %v62 = vmul.f32 %v42, %v59
  %v63 = vmul.f32 %v47, %v59
  %v64 = vmul.f32 %v52, %v59
  %v65 = vmul.f32 %v57, %v59
  %v66 = vadd.f32 %v27, %v60
  %v67 = vadd.f32 %v27, %v61
  %v68 = vadd.f32 %v27, %v62
  %v69 = vadd.f32 %v27, %v63
  %v70 = vadd.f32 %v27, %v64
  %v71 = vadd.f32 %v27, %v65
  %72 = vset.pattern.permute.xlu0 1
  %73 = vperm.xlu0 %72, %v17
  %v74 = vpop.permute.xlu0 %73
  %76 = vset.pattern.permute.xlu0 1
  %77 = vperm.xlu0 %76, %v18
  %v78 = vpop.permute.xlu0 %77
  %80 = vset.pattern.permute.xlu0 1
  %81 = vperm.xlu0 %80, %v19
  %v82 = vpop.permute.xlu0 %81
  %84 = vset.pattern.permute.xlu0 1
  %85 = vperm.xlu0 %84, %v20
  %v86 = vpop.permute.xlu0 %85
  %88 = vset.pattern.permute.xlu0 1
  %89 = vperm.xlu0 %88, %v21
  %v90 = vpop.permute.xlu0 %89
  %92 = vset.pattern.permute.xlu0 1
  %93 = vperm.xlu0 %92, %v22
  %v94 = vpop.permute.xlu0 %93
  %v96 = vperm.slane %v23, 1
  %v97 = vmul.f32 %v74, %v96
  %v98 = vmul.f32 %v78, %v96
  %v99 = vmul.f32 %v82, %v96
  %v100 = vmul.f32 %v86, %v96
  %v101 = vmul.f32 %v90, %v96
  %v102 = vmul.f32 %v94, %v96
  %v103 = vadd.f32 %v66, %v97
  %v104 = vadd.f32 %v67, %v98
  %v105 = vadd.f32 %v68, %v99
  %v106 = vadd.f32 %v69, %v100
  %v107 = vadd.f32 %v70, %v101
  %v108 = vadd.f32 %v71, %v102
  %109 = vset.pattern.permute.xlu0 2
  %110 = vperm.xlu0 %109, %v17
  %v111 = vpop.permute.xlu0 %110
  %113 = vset.pattern.permute.xlu0 2
  %114 = vperm.xlu0 %113, %v18
  %v115 = vpop.permute.xlu0 %114
  %117 = vset.pattern.permute.xlu0 2
  %118 = vperm.xlu0 %117, %v19
  %v119 = vpop.permute.xlu0 %118
  %121 = vset.pattern.permute.xlu0 2
  %122 = vperm.xlu0 %121, %v20
  %v123 = vpop.permute.xlu0 %122
  %125 = vset.pattern.permute.xlu0 2
  %126 = vperm.xlu0 %125, %v21
  %v127 = vpop.permute.xlu0 %126
  %129 = vset.pattern.permute.xlu0 2
  %130 = vperm.xlu0 %129, %v22
  %v131 = vpop.permute.xlu0 %130
  %v133 = vperm.slane %v23, 2
  %v134 = vmul.f32 %v111, %v133
  %v135 = vmul.f32 %v115, %v133
  %v136 = vmul.f32 %v119, %v133
  %v137 = vmul.f32 %v123, %v133
  %v138 = vmul.f32 %v127, %v133
  %v139 = vmul.f32 %v131, %v133
  %v140 = vadd.f32 %v103, %v134
  %v141 = vadd.f32 %v104, %v135
  %v142 = vadd.f32 %v105, %v136
  %v143 = vadd.f32 %v106, %v137
  %v144 = vadd.f32 %v107, %v138
  %v145 = vadd.f32 %v108, %v139
  %146 = vset.pattern.permute.xlu0 3
  %147 = vperm.xlu0 %146, %v17
  %v148 = vpop.permute.xlu0 %147
  %150 = vset.pattern.permute.xlu0 3
  %151 = vperm.xlu0 %150, %v18
  %v152 = vpop.permute.xlu0 %151
  %154 = vset.pattern.permute.xlu0 3
  %155 = vperm.xlu0 %154, %v19
  %v156 = vpop.permute.xlu0 %155
  %158 = vset.pattern.permute.xlu0 3
  %159 = vperm.xlu0 %158, %v20
  %v160 = vpop.permute.xlu0 %159
  %162 = vset.pattern.permute.xlu0 3
  %163 = vperm.xlu0 %162, %v21
  %v164 = vpop.permute.xlu0 %163
  %166 = vset.pattern.permute.xlu0 3
  %167 = vperm.xlu0 %166, %v22
  %v168 = vpop.permute.xlu0 %167
  %v170 = vperm.slane %v23, 3
  %v171 = vmul.f32 %v148, %v170
  %v172 = vmul.f32 %v152, %v170
  %v173 = vmul.f32 %v156, %v170
  %v174 = vmul.f32 %v160, %v170
  %v175 = vmul.f32 %v164, %v170
  %v176 = vmul.f32 %v168, %v170
  %v177 = vadd.f32 %v140, %v171
  %v178 = vadd.f32 %v141, %v172
  %v179 = vadd.f32 %v142, %v173
  %v180 = vadd.f32 %v143, %v174
  %v181 = vadd.f32 %v144, %v175
  %v182 = vadd.f32 %v145, %v176
  %183 = vset.pattern.permute.xlu0 4
  %184 = vperm.xlu0 %183, %v17
  %v185 = vpop.permute.xlu0 %184
  %187 = vset.pattern.permute.xlu0 4
  %188 = vperm.xlu0 %187, %v18
  %v189 = vpop.permute.xlu0 %188
  %191 = vset.pattern.permute.xlu0 4
  %192 = vperm.xlu0 %191, %v19
  %v193 = vpop.permute.xlu0 %192
  %195 = vset.pattern.permute.xlu0 4
  %196 = vperm.xlu0 %195, %v20
  %v197 = vpop.permute.xlu0 %196
  %199 = vset.pattern.permute.xlu0 4
  %200 = vperm.xlu0 %199, %v21
  %v201 = vpop.permute.xlu0 %200
  %203 = vset.pattern.permute.xlu0 4
  %204 = vperm.xlu0 %203, %v22
  %v205 = vpop.permute.xlu0 %204
  %v207 = vperm.slane %v23, 4
  %v208 = vmul.f32 %v185, %v207
  %v209 = vmul.f32 %v189, %v207
  %v210 = vmul.f32 %v193, %v207
  %v211 = vmul.f32 %v197, %v207
  %v212 = vmul.f32 %v201, %v207
  %v213 = vmul.f32 %v205, %v207
  %v214 = vadd.f32 %v177, %v208
  %v215 = vadd.f32 %v178, %v209
  %v216 = vadd.f32 %v179, %v210
  %v217 = vadd.f32 %v180, %v211
  %v218 = vadd.f32 %v181, %v212
  %v219 = vadd.f32 %v182, %v213
  %v220 = vperm.slane %v24, 0
  %v221 = vperm.slane %v24, 1
  %v222 = vperm.slane %v24, 2
  %v223 = vperm.slane %v24, 3
  %v224 = vperm.slane %v24, 4
  %v225 = vmul.f32 %v220, 0.0
  %v226 = vadd.f32 %v214, %v225
  %v227 = vmul.f32 %v221, 0.0
  %v228 = vadd.f32 %v226, %v227
  %v229 = vmul.f32 %v222, 0.0
  %v230 = vadd.f32 %v228, %v229
  %v231 = vmul.f32 %v223, 0.0
  %v232 = vadd.f32 %v230, %v231
  %v233 = vmul.f32 %v224, 0.0
  %v234 = vadd.f32 %v232, %v233
  %v235 = vtanh.pop %v234
  %vm236 = vcmask 34816
  %237 = vst.msk [vmem:[%s4] sm:$0x7] %vm236, %v235
  %239 = vset.pattern.permute.xlu0 0
  %240 = vperm.xlu0 %239, %v235
  %v241 = vpop.permute.xlu0 %240
  %v243 = vmul.f32 %v241, %v220
  %v244 = vadd.f32 %v215, %v243
  %245 = vset.pattern.permute.xlu0 1
  %246 = vperm.xlu0 %245, %v235
  %v247 = vpop.permute.xlu0 %246
  %v249 = vmul.f32 %v247, %v221
  %v250 = vadd.f32 %v244, %v249
  %251 = vset.pattern.permute.xlu0 2
  %252 = vperm.xlu0 %251, %v235
  %v253 = vpop.permute.xlu0 %252
  %v255 = vmul.f32 %v253, %v222
  %v256 = vadd.f32 %v250, %v255
  %257 = vset.pattern.permute.xlu0 3
  %258 = vperm.xlu0 %257, %v235
  %v259 = vpop.permute.xlu0 %258
  %v261 = vmul.f32 %v259, %v223
  %v262 = vadd.f32 %v256, %v261
  %263 = vset.pattern.permute.xlu0 4
  %264 = vperm.xlu0 %263, %v235
  %v265 = vpop.permute.xlu0 %264
  %v267 = vmul.f32 %v265, %v224
  %v268 = vadd.f32 %v262, %v267
  %v269 = vtanh.pop %v268
  %s270 = scalar_lea.vmem %s4, 4
  %271 = vst.msk [vmem:[%s270] sm:$0x7] %vm236, %v269
  %273 = vset.pattern.permute.xlu0 0
  %274 = vperm.xlu0 %273, %v269
  %v275 = vpop.permute.xlu0 %274
  %v277 = vmul.f32 %v275, %v220
  %v278 = vadd.f32 %v216, %v277
  %279 = vset.pattern.permute.xlu0 1
  %280 = vperm.xlu0 %279, %v269
  %v281 = vpop.permute.xlu0 %280
  %v283 = vmul.f32 %v281, %v221
  %v284 = vadd.f32 %v278, %v283
  %285 = vset.pattern.permute.xlu0 2
  %286 = vperm.xlu0 %285, %v269
  %v287 = vpop.permute.xlu0 %286
  %v289 = vmul.f32 %v287, %v222
  %v290 = vadd.f32 %v284, %v289
  %291 = vset.pattern.permute.xlu0 3
  %292 = vperm.xlu0 %291, %v269
  %v293 = vpop.permute.xlu0 %292
  %v295 = vmul.f32 %v293, %v223
  %v296 = vadd.f32 %v290, %v295
  %297 = vset.pattern.permute.xlu0 4
  %298 = vperm.xlu0 %297, %v269
  %v299 = vpop.permute.xlu0 %298
  %v301 = vmul.f32 %v299, %v224
  %v302 = vadd.f32 %v296, %v301
  %v303 = vtanh.pop %v302
  %s304 = scalar_lea.vmem %s4, 8
  %305 = vst.msk [vmem:[%s304] sm:$0x7] %vm236, %v303
  %307 = vset.pattern.permute.xlu0 0
  %308 = vperm.xlu0 %307, %v303
  %v309 = vpop.permute.xlu0 %308
  %v311 = vmul.f32 %v309, %v220
  %v312 = vadd.f32 %v217, %v311
  %313 = vset.pattern.permute.xlu0 1
  %314 = vperm.xlu0 %313, %v303
  %v315 = vpop.permute.xlu0 %314
  %v317 = vmul.f32 %v315, %v221
  %v318 = vadd.f32 %v312, %v317
  %319 = vset.pattern.permute.xlu0 2
  %320 = vperm.xlu0 %319, %v303
  %v321 = vpop.permute.xlu0 %320
  %v323 = vmul.f32 %v321, %v222
  %v324 = vadd.f32 %v318, %v323
  %325 = vset.pattern.permute.xlu0 3
  %326 = vperm.xlu0 %325, %v303
  %v327 = vpop.permute.xlu0 %326
  %v329 = vmul.f32 %v327, %v223
  %v330 = vadd.f32 %v324, %v329
  %331 = vset.pattern.permute.xlu0 4
  %332 = vperm.xlu0 %331, %v303
  %v333 = vpop.permute.xlu0 %332
  %v335 = vmul.f32 %v333, %v224
  %v336 = vadd.f32 %v330, %v335
  %v337 = vtanh.pop %v336
  %s338 = scalar_lea.vmem %s4, 12
  %339 = vst.msk [vmem:[%s338] sm:$0x7] %vm236, %v337
  %341 = vset.pattern.permute.xlu0 0
  %342 = vperm.xlu0 %341, %v337
  %v343 = vpop.permute.xlu0 %342
  %v345 = vmul.f32 %v343, %v220
  %v346 = vadd.f32 %v218, %v345
  %347 = vset.pattern.permute.xlu0 1
  %348 = vperm.xlu0 %347, %v337
  %v349 = vpop.permute.xlu0 %348
  %v351 = vmul.f32 %v349, %v221
  %v352 = vadd.f32 %v346, %v351
  %353 = vset.pattern.permute.xlu0 2
  %354 = vperm.xlu0 %353, %v337
  %v355 = vpop.permute.xlu0 %354
  %v357 = vmul.f32 %v355, %v222
  %v358 = vadd.f32 %v352, %v357
  %359 = vset.pattern.permute.xlu0 3
  %360 = vperm.xlu0 %359, %v337
  %v361 = vpop.permute.xlu0 %360
  %v363 = vmul.f32 %v361, %v223
  %v364 = vadd.f32 %v358, %v363
  %365 = vset.pattern.permute.xlu0 4
  %366 = vperm.xlu0 %365, %v337
  %v367 = vpop.permute.xlu0 %366
  %v369 = vmul.f32 %v367, %v224
  %v370 = vadd.f32 %v364, %v369
  %v371 = vtanh.pop %v370
  %s372 = scalar_lea.vmem %s4, 16
  %373 = vst.msk [vmem:[%s372] sm:$0x7] %vm236, %v371
  %375 = vset.pattern.permute.xlu0 0
  %376 = vperm.xlu0 %375, %v371
  %v377 = vpop.permute.xlu0 %376
  %v379 = vmul.f32 %v377, %v220
  %v380 = vadd.f32 %v219, %v379
  %381 = vset.pattern.permute.xlu0 1
  %382 = vperm.xlu0 %381, %v371
  %v383 = vpop.permute.xlu0 %382
  %v385 = vmul.f32 %v383, %v221
  %v386 = vadd.f32 %v380, %v385
  %387 = vset.pattern.permute.xlu0 2
  %388 = vperm.xlu0 %387, %v371
  %v389 = vpop.permute.xlu0 %388
  %v391 = vmul.f32 %v389, %v222
  %v392 = vadd.f32 %v386, %v391
  %393 = vset.pattern.permute.xlu0 3
  %394 = vperm.xlu0 %393, %v371
  %v395 = vpop.permute.xlu0 %394
  %v397 = vmul.f32 %v395, %v223
  %v398 = vadd.f32 %v392, %v397
  %399 = vset.pattern.permute.xlu0 4
  %400 = vperm.xlu0 %399, %v371
  %v401 = vpop.permute.xlu0 %400
  %v403 = vmul.f32 %v401, %v224
  %v404 = vadd.f32 %v398, %v403
  %v405 = vtanh.pop %v404
  %s406 = scalar_lea.vmem %s4, 20
  %407 = vst.msk [vmem:[%s406] sm:$0x7] %vm236, %v405
  // Predicated region
  $region18: #{rnn_forward.1} parent=0 // pred_check
    _
  $region19: #{rnn_forward.1} parent=0 // pred_check_branch
    %409 = sbr.rel (0) target = $region21
  $region20: #{rnn_forward.1} parent=0 // pred_region
    _
  $region21: #{rnn_forward.1} parent=0 // pred_fallthru
    _
  // Predicated region
  $region22: #{rnn_forward.1} parent=0 // pred_check
    _
  $region23: #{rnn_forward.1} parent=0 // pred_check_branch
    %411 = sbr.rel (0) target = $region25
  $region24: #{rnn_forward.1} parent=0 // pred_region
    _
  $region25: #{rnn_forward.1} parent=0 // pred_fallthru
    _

</llo_original>
